<compile_context>
chip_gen: v6e
topology: v6e:2x2x1
jax: 0.10.0
libtpu: 0.0.40
codegen_flags: <defaults>
</compile_context>

<pallas_src>
import jax
import jax.numpy as jnp
from jax import lax
from jax.experimental import pallas as pl
from jax.experimental.pallas import tpu as pltpu


def _mf_bpr_kernel(u_ref, pos_ref, neg_ref, score_ref, rowloss_ref):
    """One grid step per batch tile (batch on lanes, D on sublanes).

    u_ref:       (D, TB)        user embeddings (transposed)
    pos_ref:     (D, TB)        positive item embeddings (transposed)
    neg_ref:     (NNEG, D, TB)  negative item embeddings (transposed)
    score_ref:   (1, TB)        positive scores (lane-dense)
    rowloss_ref: (1, TB)        per-row  sum_i softplus(neg_i - pos)
    """
    u = u_ref[...]                                         # (D, TB)
    pos = pos_ref[...]                                     # (D, TB)

    # Sublane reduce over D -> result is already lane-dense (1, TB).
    pos_score = jnp.sum(u * pos, axis=0, keepdims=True)    # (1, TB)

    n_neg = neg_ref.shape[0]

    def body(i, acc):
        neg = neg_ref[i]                                   # (D, TB)
        neg_score = jnp.sum(u * neg, axis=0, keepdims=True)
        x = neg_score - pos_score                          # (1, TB)
        # Stable softplus: -log(sigmoid(pos-neg)) = softplus(neg-pos)
        #                 = max(x,0) + log1p(exp(-|x|)).
        sp = jnp.maximum(x, 0.0) + jnp.log1p(jnp.exp(-jnp.abs(x)))
        return acc + sp

    # Unrolled loop over negatives: only one (D, TB) temporary live at a time
    # instead of the full (NNEG, D, TB) broadcast product.
    rowloss = lax.fori_loop(0, n_neg, body, jnp.zeros_like(pos_score),
                            unroll=True)

    score_ref[...] = pos_score
    rowloss_ref[...] = rowloss


def _pick_batch_tile(B, D, n_neg, vmem_budget_bytes):
    """Largest batch (lane-axis) tile fitting the double-buffered VMEM budget.

    Legal tiles are multiples of 128 that divide B, or the full batch.  When
    the batch allows it we prefer >=2 grid steps so v7x's two TensorCores both
    get work ('parallel' grid axis).
    """
    if B % 128 != 0:
        # Only legal tile is the full batch.
        # TODO(synk): pad/mask ragged production batches to a 128 multiple.
        return B
    # f32 bytes resident per batch column: double-buffered user+pos+neg input
    # slabs plus the two (1, tb) f32 outputs (also double-buffered).
    per_col = 2 * 4 * D * (2 + n_neg) + 2 * 2 * 4
    budget_cols = max(128, (vmem_budget_bytes // 2) // per_col)

    # Candidate tiles: multiples of 128 that divide B.
    candidates = [t for t in range(128, B + 1, 128) if B % t == 0]
    in_budget = [t for t in candidates if t <= budget_cols]
    tb = max(in_budget) if in_budget else candidates[0]
    # Prefer >=2 grid steps (v7x megacore) when a smaller legal tile exists.
    if tb == B and len(candidates) > 1:
        tb = max(t for t in candidates if t < B)
    return tb


def mf_bpr_forward(user_emb_t, pos_emb_t, neg_emb_t, *,
                   vmem_budget_bytes=48 << 20):
    """user_emb_t/pos_emb_t: (D, B) f32; neg_emb_t: (NNEG, D, B) f32.

    Returns (pos_scores (B,), scalar BPR loss).
    Halve vmem_budget_bytes (e.g. 24 MiB) when targeting v7x (64 MiB VMEM/TC).
    Inputs may also be stored in bf16 to halve HBM traffic (upcast in-kernel);
    kept f32 here so the reference check is exact.
    """
    D, B = user_emb_t.shape
    n_neg = neg_emb_t.shape[0]

    tb = _pick_batch_tile(B, D, n_neg, vmem_budget_bytes)
    assert B % tb == 0
    nt = B // tb

    scores, row_loss = pl.pallas_call(
        _mf_bpr_kernel,
        out_shape=(
            jax.ShapeDtypeStruct((1, B), jnp.float32),   # positive scores
            jax.ShapeDtypeStruct((1, B), jnp.float32),   # per-row softplus sums
        ),
        grid=(nt,),
        in_specs=[
            pl.BlockSpec((D, tb), lambda i: (0, i)),            # user tile
            pl.BlockSpec((D, tb), lambda i: (0, i)),            # positive tile
            pl.BlockSpec((n_neg, D, tb), lambda i: (0, 0, i)),  # negatives tile
        ],
        out_specs=(
            pl.BlockSpec((1, tb), lambda i: (0, i)),
            pl.BlockSpec((1, tb), lambda i: (0, i)),
        ),
        compiler_params=pltpu.CompilerParams(
            dimension_semantics=("parallel",),
            vmem_limit_bytes=int(vmem_budget_bytes)),
    )(user_emb_t, pos_emb_t, neg_emb_t)

    # Normalize once over the full batch and all negative samples (tiling-safe).
    loss = jnp.sum(row_loss) / jnp.float32(B * n_neg)
    return scores[0], loss


if __name__ == "__main__":
    # Model / batch hyper-parameters (small, consistent with the module).
    num_user = 64
    num_item = 128
    embed_dim = 32
    batch = 8
    num_neg_sample = 3

    key = jax.random.PRNGKey(0)
    k_u, k_i, k_uid, k_iid, k_neg = jax.random.split(key, 5)

    # Deterministic parameter init: normal(0, 1/embed_dim), as in the module.
    user_table = (1.0 / embed_dim) * jax.random.normal(
        k_u, (num_user, embed_dim), dtype=jnp.float32)
    item_table = (1.0 / embed_dim) * jax.random.normal(
        k_i, (num_item, embed_dim), dtype=jnp.float32)

    # Batch of (user, positive item) interactions + negative item samples.
    user_ids = jax.random.randint(k_uid, (batch,), 0, num_user)
    item_ids = jax.random.randint(k_iid, (batch,), 0, num_item)
    neg_item_ids = jax.random.randint(
        k_neg, (num_neg_sample, batch), 0, num_item)

    # Embedding lookups (nn.Embedding) as plain-JAX glue, gathering from
    # pre-transposed tables so kernel inputs are already batch-on-lanes.
    # TODO(synk): fuse these gathers into the kernel (scalar-prefetched ids +
    #             pl.Element / manual DMA) to kill the HBM slab round trip.
    user_table_t = user_table.T                                   # (D, num_user)
    item_table_t = item_table.T                                   # (D, num_item)
    user_emb_t = user_table_t[:, user_ids]                        # (D, B)
    pos_emb_t = item_table_t[:, item_ids]                         # (D, B)
    neg_emb_t = jnp.moveaxis(item_table_t[:, neg_item_ids], 1, 0)  # (NNEG, D, B)

    scores, loss = mf_bpr_forward(user_emb_t, pos_emb_t, neg_emb_t)
    jax.block_until_ready((scores, loss))

    # Pure-JAX reference for correctness (stable softplus form of BPR loss).
    ref_pos = jnp.sum(user_emb_t * pos_emb_t, axis=0)              # (B,)
    ref_neg = jnp.sum(user_emb_t[None] * neg_emb_t, axis=1)        # (NNEG, B)
    ref_loss = jnp.mean(jax.nn.softplus(ref_neg - ref_pos[None]))

    assert jnp.allclose(scores, ref_pos, atol=1e-5, rtol=1e-5)
    assert jnp.allclose(loss, ref_loss, atol=1e-5, rtol=1e-5)

    print("KERNEL_OK")
</pallas_src>

<mosaic_0001>
module attributes {stable_mosaic.version = 11 : i64} {
  func.func @_mf_bpr_kernel(%arg0: i32, %arg1: memref<32x8xf32, #tpu.memory_space<vmem>>, %arg2: memref<32x8xf32, #tpu.memory_space<vmem>>, %arg3: memref<3x32x8xf32, #tpu.memory_space<vmem>>, %arg4: memref<1x8xf32, #tpu.memory_space<vmem>>, %arg5: memref<1x8xf32, #tpu.memory_space<vmem>>) attributes {dimension_semantics = [#tpu.dimension_semantics<parallel>], iteration_bounds = array<i64: 1>, scalar_prefetch = 0 : i64, scratch_operands = 0 : i64, tpu.core_type = #tpu.core_type<tc>, window_params = [{transform_indices = @transform_0, window_bounds = array<i64: 32, 8>}, {transform_indices = @transform_1, window_bounds = array<i64: 32, 8>}, {transform_indices = @transform_2, window_bounds = array<i64: 3, 32, 8>}, {transform_indices = @transform_3, window_bounds = array<i64: 1, 8>}, {transform_indices = @transform_4, window_bounds = array<i64: 1, 8>}]} {
    %c0 = arith.constant 0 : index
    %c0_0 = arith.constant 0 : index
    %0 = vector.load %arg1[%c0, %c0_0] : memref<32x8xf32, #tpu.memory_space<vmem>>, vector<32x8xf32>
    %c0_1 = arith.constant 0 : index
    %c0_2 = arith.constant 0 : index
    %1 = vector.load %arg2[%c0_1, %c0_2] : memref<32x8xf32, #tpu.memory_space<vmem>>, vector<32x8xf32>
    %2 = arith.mulf %0, %1 : vector<32x8xf32>
    %cst = arith.constant dense<0.000000e+00> : vector<8xf32>
    %3 = vector.multi_reduction <add>, %2, %cst [0] : vector<32x8xf32> to vector<8xf32>
    %4 = vector.shape_cast %3 : vector<8xf32> to vector<1x8xf32>
    %cst_3 = arith.constant 0.000000e+00 : f32
    %5 = vector.broadcast %cst_3 : f32 to vector<1x8xf32>
    %c0_i32 = arith.constant 0 : i32
    %6 = arith.index_cast %c0_i32 : i32 to index
    %c0_4 = arith.constant 0 : index
    %c0_5 = arith.constant 0 : index
    %7 = vector.load %arg3[%6, %c0_4, %c0_5] : memref<3x32x8xf32, #tpu.memory_space<vmem>>, vector<1x32x8xf32>
    %8 = vector.shape_cast %7 : vector<1x32x8xf32> to vector<32x8xf32>
    %9 = arith.mulf %0, %8 : vector<32x8xf32>
    %cst_6 = arith.constant dense<0.000000e+00> : vector<8xf32>
    %10 = vector.multi_reduction <add>, %9, %cst_6 [0] : vector<32x8xf32> to vector<8xf32>
    %11 = vector.shape_cast %10 : vector<8xf32> to vector<1x8xf32>
    %12 = arith.subf %11, %4 : vector<1x8xf32>
    %cst_7 = arith.constant 0.000000e+00 : f32
    %13 = vector.broadcast %cst_7 : f32 to vector<1x8xf32>
    %14 = arith.maximumf %12, %13 : vector<1x8xf32>
    %15 = math.absf %12 : vector<1x8xf32>
    %cst_8 = arith.constant 0.000000e+00 : f32
    %16 = vector.broadcast %cst_8 : f32 to vector<1x8xf32>
    %17 = arith.subf %16, %15 : vector<1x8xf32>
    %18 = math.exp %17 : vector<1x8xf32>
    %19 = math.log1p %18 : vector<1x8xf32>
    %20 = arith.addf %14, %19 : vector<1x8xf32>
    %21 = arith.addf %5, %20 : vector<1x8xf32>
    %c1_i32 = arith.constant 1 : i32
    %22 = arith.index_cast %c1_i32 : i32 to index
    %c0_9 = arith.constant 0 : index
    %c0_10 = arith.constant 0 : index
    %23 = vector.load %arg3[%22, %c0_9, %c0_10] : memref<3x32x8xf32, #tpu.memory_space<vmem>>, vector<1x32x8xf32>
    %24 = vector.shape_cast %23 : vector<1x32x8xf32> to vector<32x8xf32>
    %25 = arith.mulf %0, %24 : vector<32x8xf32>
    %cst_11 = arith.constant dense<0.000000e+00> : vector<8xf32>
    %26 = vector.multi_reduction <add>, %25, %cst_11 [0] : vector<32x8xf32> to vector<8xf32>
    %27 = vector.shape_cast %26 : vector<8xf32> to vector<1x8xf32>
    %28 = arith.subf %27, %4 : vector<1x8xf32>
    %cst_12 = arith.constant 0.000000e+00 : f32
    %29 = vector.broadcast %cst_12 : f32 to vector<1x8xf32>
    %30 = arith.maximumf %28, %29 : vector<1x8xf32>
    %31 = math.absf %28 : vector<1x8xf32>
    %cst_13 = arith.constant 0.000000e+00 : f32
    %32 = vector.broadcast %cst_13 : f32 to vector<1x8xf32>
    %33 = arith.subf %32, %31 : vector<1x8xf32>
    %34 = math.exp %33 : vector<1x8xf32>
    %35 = math.log1p %34 : vector<1x8xf32>
    %36 = arith.addf %30, %35 : vector<1x8xf32>
    %37 = arith.addf %21, %36 : vector<1x8xf32>
    %c2_i32 = arith.constant 2 : i32
    %38 = arith.index_cast %c2_i32 : i32 to index
    %c0_14 = arith.constant 0 : index
    %c0_15 = arith.constant 0 : index
    %39 = vector.load %arg3[%38, %c0_14, %c0_15] : memref<3x32x8xf32, #tpu.memory_space<vmem>>, vector<1x32x8xf32>
    %40 = vector.shape_cast %39 : vector<1x32x8xf32> to vector<32x8xf32>
    %41 = arith.mulf %0, %40 : vector<32x8xf32>
    %cst_16 = arith.constant dense<0.000000e+00> : vector<8xf32>
    %42 = vector.multi_reduction <add>, %41, %cst_16 [0] : vector<32x8xf32> to vector<8xf32>
    %43 = vector.shape_cast %42 : vector<8xf32> to vector<1x8xf32>
    %44 = arith.subf %43, %4 : vector<1x8xf32>
    %cst_17 = arith.constant 0.000000e+00 : f32
    %45 = vector.broadcast %cst_17 : f32 to vector<1x8xf32>
    %46 = arith.maximumf %44, %45 : vector<1x8xf32>
    %47 = math.absf %44 : vector<1x8xf32>
    %cst_18 = arith.constant 0.000000e+00 : f32
    %48 = vector.broadcast %cst_18 : f32 to vector<1x8xf32>
    %49 = arith.subf %48, %47 : vector<1x8xf32>
    %50 = math.exp %49 : vector<1x8xf32>
    %51 = math.log1p %50 : vector<1x8xf32>
    %52 = arith.addf %46, %51 : vector<1x8xf32>
    %53 = arith.addf %37, %52 : vector<1x8xf32>
    %c3_i32 = arith.constant 3 : i32
    %c0_19 = arith.constant 0 : index
    %c0_20 = arith.constant 0 : index
    %54 = vector.load %arg4[%c0_19, %c0_20] : memref<1x8xf32, #tpu.memory_space<vmem>>, vector<1x8xf32>
    tpu.vector_store %arg4[%c0_19, %c0_20], %4 {strides = array<i32>} : memref<1x8xf32, #tpu.memory_space<vmem>>, vector<1x8xf32>,
    %c0_21 = arith.constant 0 : index
    %c0_22 = arith.constant 0 : index
    %55 = vector.load %arg5[%c0_21, %c0_22] : memref<1x8xf32, #tpu.memory_space<vmem>>, vector<1x8xf32>
    tpu.vector_store %arg5[%c0_21, %c0_22], %53 {strides = array<i32>} : memref<1x8xf32, #tpu.memory_space<vmem>>, vector<1x8xf32>,
    return
  }
  func.func @transform_0(%arg0: i32) -> (i32, i32) {
    %c0_i32 = arith.constant 0 : i32
    %c0_i32_0 = arith.constant 0 : i32
    return %c0_i32, %arg0 : i32, i32
  }
  func.func @transform_1(%arg0: i32) -> (i32, i32) {
    %c0_i32 = arith.constant 0 : i32
    %c0_i32_0 = arith.constant 0 : i32
    return %c0_i32, %arg0 : i32, i32
  }
  func.func @transform_2(%arg0: i32) -> (i32, i32, i32) {
    %c0_i32 = arith.constant 0 : i32
    %c0_i32_0 = arith.constant 0 : i32
    %c0_i32_1 = arith.constant 0 : i32
    return %c0_i32, %c0_i32_0, %arg0 : i32, i32, i32
  }
  func.func @transform_3(%arg0: i32) -> (i32, i32) {
    %c0_i32 = arith.constant 0 : i32
    %c0_i32_0 = arith.constant 0 : i32
    return %c0_i32, %arg0 : i32, i32
  }
  func.func @transform_4(%arg0: i32) -> (i32, i32) {
    %c0_i32 = arith.constant 0 : i32
    %c0_i32_0 = arith.constant 0 : i32
    return %c0_i32, %arg0 : i32, i32
  }
}

</mosaic_0001>

<llo_original>
// kernel: tpu_custom_call.1
$region0: #{tpu_custom_call.1}
  #allocation0 [shape = 'u32[]', space=smem, size = 0x4, offset = 0x4, fixed_abs, tag = 'smem constant byte address 0x4 - core index']
  #allocation1 [shape = 'u32[144,128]{1,0:T(1,128)}', space=vmem, size = 0x12000, scoped, tag = 'internal scratch']
  %s0 = inlined_call_operand.vmem [shape: f32[32,8], index: 0, kind: input, shape index: {}]
  %s1 = inlined_call_operand.vmem [shape: f32[32,8], index: 1, kind: input, shape index: {}]
  %s2 = inlined_call_operand.vmem [shape: f32[3,32,8], index: 2, kind: input, shape index: {}]
  %s3 = inlined_call_operand.hbm [shape: f32[1,8], index: 3, kind: output, shape index: {0}]
  %s4 = inlined_call_operand.hbm [shape: f32[1,8], index: 4, kind: output, shape index: {1}]
  %5 = xla_tuple %s3, %s4
  %s6 = sld [smem:[#allocation0]]
  $region30: #{tpu_custom_call.1} parent=0
    _
  %s8 = ssub.s32 1, %s6
  %s9 = scalar_select 0, %s8, %s6
  $region1: #{tpu_custom_call.1} parent=0
    #allocation2 [shape = 'u8[512]{0}', space=vmem, size = 0x400, scoped, tag = 'output window, operand 0, single buffered']
    #allocation3 [shape = 's32[1]{0}', space=sflag, size = 0x4, scoped, tag = 'scoped memory for tpu_custom_call.1']
    #allocation4 [shape = 'u8[512]{0}', space=vmem, size = 0x400, scoped, tag = 'output window, operand 1, single buffered']
    #allocation5 [shape = 's32[1]{0}', space=sflag, size = 0x4, scoped, tag = 'scoped memory for tpu_custom_call.1']
    %10 = vsyncpa [#allocation3], 0
    %11 = vsyncpa [#allocation5], 0
    // Predicated region
    $region2: #{tpu_custom_call.1} parent=1 // pred_check
      _
    $region3: #{tpu_custom_call.1} parent=1 // pred_check_branch
      %13 = sbr.rel (0) target = $region5
    $region4: #{tpu_custom_call.1} parent=1 // pred_region
      _
    $region5: #{tpu_custom_call.1} parent=1 // pred_fallthru
      _
    // Predicated region
    $region6: #{tpu_custom_call.1} parent=1 // pred_check
      _
    $region7: #{tpu_custom_call.1} parent=1 // pred_check_branch
      %15 = sbr.rel (0) target = $region9
    $region8: #{tpu_custom_call.1} parent=1 // pred_region
      _
    $region9: #{tpu_custom_call.1} parent=1 // pred_fallthru
      _
    // Predicated region
    $region10: #{tpu_custom_call.1} parent=1 // pred_check
      _
    $region11: #{tpu_custom_call.1} parent=1 // pred_check_branch
      %17 = sbr.rel (0) target = $region13
    $region12: #{tpu_custom_call.1} parent=1 // pred_region
      _
    $region13: #{tpu_custom_call.1} parent=1 // pred_fallthru
      _
    %v18 = vld [vmem:[%s0] sm:$0xff]
    %v19 = vld [vmem:[%s0 + $0x8] sm:$0xff]
    %v20 = vld [vmem:[%s0 + $0x10] sm:$0xff]
    %v21 = vld [vmem:[%s0 + $0x18] sm:$0xff]
    %v22 = vld [vmem:[%s1] sm:$0xff]
    %v23 = vld [vmem:[%s1 + $0x8] sm:$0xff]
    %v24 = vld [vmem:[%s1 + $0x10] sm:$0xff]
    %v25 = vld [vmem:[%s1 + $0x18] sm:$0xff]
    %v26 = vmul.f32 %v18, %v22
    %v27 = vmul.f32 %v19, %v23
    %v28 = vmul.f32 %v20, %v24
    %v29 = vmul.f32 %v21, %v25
    %vm30 = vcmask 64512
    %v31 = vsel %vm30, %v26, 0.0
    %v32 = vsel %vm30, %v27, 0.0
    %v33 = vadd.f32 %v31, %v32
    %v34 = vsel %vm30, %v28, 0.0
    %v35 = vadd.f32 %v33, %v34
    %v36 = vsel %vm30, %v29, 0.0
    %v37 = vadd.f32 %v35, %v36
    %v38 = vrot.slane %v37, 4
    %v39 = vadd.f32 %v37, %v38
    %v40 = vrot.slane %v39, 2
    %v41 = vadd.f32 %v39, %v40
    %v42 = vrot.slane %v41, 1
    %v43 = vadd.f32 %v41, %v42
    %v44 = vld [vmem:[%s2] sm:$0xff]
    %v45 = vld [vmem:[%s2 + $0x8] sm:$0xff]
    %v46 = vld [vmem:[%s2 + $0x10] sm:$0xff]
    %v47 = vld [vmem:[%s2 + $0x18] sm:$0xff]
    %v48 = vmul.f32 %v18, %v44
    %v49 = vmul.f32 %v19, %v45
    %v50 = vmul.f32 %v20, %v46
    %v51 = vmul.f32 %v21, %v47
    %v52 = vsel %vm30, %v48, 0.0
    %v53 = vsel %vm30, %v49, 0.0
    %v54 = vadd.f32 %v52, %v53
    %v55 = vsel %vm30, %v50, 0.0
    %v56 = vadd.f32 %v54, %v55
    %v57 = vsel %vm30, %v51, 0.0
    %v58 = vadd.f32 %v56, %v57
    %v59 = vrot.slane %v58, 4
    %v60 = vadd.f32 %v58, %v59
    %v61 = vrot.slane %v60, 2
    %v62 = vadd.f32 %v60, %v61
    %v63 = vrot.slane %v62, 1
    %v64 = vadd.f32 %v62, %v63
    %v65 = vsub.f32 %v64, %v43
    %v66 = vmax.f32 %v65, 0.0
    %v67 = vand.u32 2147483647, %v65
    %v68 = vsub.f32 0.0, %v67
    %v69 = vmul.f32 %v68, 1.442695
    %v70 = vpow.pop %v69
    %v71 = vadd.f32 %v70, 1.0
    %v72 = vlog2.pop %v71
    %v73 = vmul.f32 %v72, 0.6931472
    %v74 = vmul.f32 -0.5, %v70
    %v75 = vadd.f32 %v74, 1.0
    %v76 = vmul.f32 %v75, %v70
    %v77 = vand.u32 2147483647, %v70
    %vm78 = vcmp.lt.f32.partialorder %v77, 0.0004427343
    %v79 = vsel %vm78, %v76, %v73
    %v80 = vadd.f32 %v66, %v79
    %v81 = vadd.f32 %v80, 0.0
    %s82 = scalar_lea.vmem %s2, 32
    %v83 = vld [vmem:[%s82] sm:$0xff]
    %v84 = vld [vmem:[%s82 + $0x8] sm:$0xff]
    %v85 = vld [vmem:[%s82 + $0x10] sm:$0xff]
    %v86 = vld [vmem:[%s82 + $0x18] sm:$0xff]
    %v87 = vmul.f32 %v18, %v83
    %v88 = vmul.f32 %v19, %v84
    %v89 = vmul.f32 %v20, %v85
    %v90 = vmul.f32 %v21, %v86
    %v91 = vsel %vm30, %v87, 0.0
    %v92 = vsel %vm30, %v88, 0.0
    %v93 = vadd.f32 %v91, %v92
    %v94 = vsel %vm30, %v89, 0.0
    %v95 = vadd.f32 %v93, %v94
    %v96 = vsel %vm30, %v90, 0.0
    %v97 = vadd.f32 %v95, %v96
    %v98 = vrot.slane %v97, 4
    %v99 = vadd.f32 %v97, %v98
    %v100 = vrot.slane %v99, 2
    %v101 = vadd.f32 %v99, %v100
    %v102 = vrot.slane %v101, 1
    %v103 = vadd.f32 %v101, %v102
    %v104 = vsub.f32 %v103, %v43
    %v105 = vmax.f32 %v104, 0.0
    %v106 = vand.u32 2147483647, %v104
    %v107 = vsub.f32 0.0, %v106
    %v108 = vmul.f32 %v107, 1.442695
    %v109 = vpow.pop %v108
    %v110 = vadd.f32 %v109, 1.0
    %v111 = vlog2.pop %v110
    %v112 = vmul.f32 %v111, 0.6931472
    %v113 = vmul.f32 -0.5, %v109
    %v114 = vadd.f32 %v113, 1.0
    %v115 = vmul.f32 %v114, %v109
    %v116 = vand.u32 2147483647, %v109
    %vm117 = vcmp.lt.f32.partialorder %v116, 0.0004427343
    %v118 = vsel %vm117, %v115, %v112
    %v119 = vadd.f32 %v105, %v118
    %v120 = vadd.f32 %v81, %v119
    %s121 = scalar_lea.vmem %s2, 64
    %v122 = vld [vmem:[%s121] sm:$0xff]
    %v123 = vld [vmem:[%s121 + $0x8] sm:$0xff]
    %v124 = vld [vmem:[%s121 + $0x10] sm:$0xff]
    %v125 = vld [vmem:[%s121 + $0x18] sm:$0xff]
    %v126 = vmul.f32 %v18, %v122
    %v127 = vmul.f32 %v19, %v123
    %v128 = vmul.f32 %v20, %v124
    %v129 = vmul.f32 %v21, %v125
    %v130 = vsel %vm30, %v126, 0.0
    %v131 = vsel %vm30, %v127, 0.0
    %v132 = vadd.f32 %v130, %v131
    %v133 = vsel %vm30, %v128, 0.0
    %v134 = vadd.f32 %v132, %v133
    %v135 = vsel %vm30, %v129, 0.0
    %v136 = vadd.f32 %v134, %v135
    %v137 = vrot.slane %v136, 4
    %v138 = vadd.f32 %v136, %v137
    %v139 = vrot.slane %v138, 2
    %v140 = vadd.f32 %v138, %v139
    %v141 = vrot.slane %v140, 1
    %v142 = vadd.f32 %v140, %v141
    %v143 = vsub.f32 %v142, %v43
    %v144 = vmax.f32 %v143, 0.0
    %v145 = vand.u32 2147483647, %v143
    %v146 = vsub.f32 0.0, %v145
    %v147 = vmul.f32 %v146, 1.442695
    %v148 = vpow.pop %v147
    %v149 = vadd.f32 %v148, 1.0
    %v150 = vlog2.pop %v149
    %v151 = vmul.f32 %v150, 0.6931472
    %v152 = vmul.f32 -0.5, %v148
    %v153 = vadd.f32 %v152, 1.0
    %v154 = vmul.f32 %v153, %v148
    %v155 = vand.u32 2147483647, %v148
    %vm156 = vcmp.lt.f32.partialorder %v155, 0.0004427343
    %v157 = vsel %vm156, %v154, %v151
    %v158 = vadd.f32 %v144, %v157
    %v159 = vadd.f32 %v120, %v158
    %vm160 = vcmask 57344
    %161 = vst.msk [vmem:[#allocation2] sm:$0x1] %vm160, %v43
    %162 = vst.msk [vmem:[#allocation4] sm:$0x1] %vm160, %v159
    // Predicated region
    $region14: #{tpu_custom_call.1} parent=1 // pred_check
      _
    $region15: #{tpu_custom_call.1} parent=1 // pred_check_branch
      %164 = sbr.rel (0) target = $region17
    $region16: #{tpu_custom_call.1} parent=1 // pred_region
      %s166 = ssub.s32 16, 16
      %167 = vsyncadd [#allocation3], %s166
      %s169 = sshll.u32 [#allocation2], 4
      %s170 = int_to_ptr.vmem [resolvable:$true] %s169
      %172 = dma.vmem_to_hbm [thread:$0]  %s170, 16, %s3, [#allocation3]
    $region17: #{tpu_custom_call.1} parent=1 // pred_fallthru
      _
    // Predicated region
    $region18: #{tpu_custom_call.1} parent=1 // pred_check
      _
    $region19: #{tpu_custom_call.1} parent=1 // pred_check_branch
      %174 = sbr.rel (0) target = $region21
    $region20: #{tpu_custom_call.1} parent=1 // pred_region
      %s176 = ssub.s32 16, 16
      %177 = vsyncadd [#allocation5], %s176
      %s179 = sshll.u32 [#allocation4], 4
      %s180 = int_to_ptr.vmem [resolvable:$true] %s179
      %182 = dma.vmem_to_hbm [thread:$0]  %s180, 16, %s4, [#allocation5]
    $region21: #{tpu_custom_call.1} parent=1 // pred_fallthru
      _
    // Predicated region
    $region22: #{tpu_custom_call.1} parent=1 // pred_check
      _
    $region23: #{tpu_custom_call.1} parent=1 // pred_check_branch
      %184 = sbr.rel (0) target = $region25
    $region24: #{tpu_custom_call.1} parent=1 // pred_region
      %185 = dma.done [#allocation3], 16
    $region25: #{tpu_custom_call.1} parent=1 // pred_fallthru
      _
    // Predicated region
    $region26: #{tpu_custom_call.1} parent=1 // pred_check
      _
    $region27: #{tpu_custom_call.1} parent=1 // pred_check_branch
      %187 = sbr.rel (0) target = $region29
    $region28: #{tpu_custom_call.1} parent=1 // pred_region
      %188 = dma.done [#allocation5], 16
    $region29: #{tpu_custom_call.1} parent=1 // pred_fallthru
      _
    %189 = vsyncpa [#allocation3], 1
    %190 = vsyncpa [#allocation5], 1

</llo_original>
